<compile_context>
chip_gen: v7x
topology: tpu7x:2x2x1
jax: 0.10.0
libtpu: 0.0.40
codegen_flags: <defaults>
</compile_context>

<pallas_src>
import jax
import jax.numpy as jnp
from jax.experimental import pallas as pl
from jax.experimental.pallas import tpu as pltpu

LANE = 128


def gcn_kernel(adj_ref, dinv_ref, x_ref, w1_ref, b1_ref, w2_ref, b2_ref, out_ref):
    adj = adj_ref[...]            # (N, N) bf16, adj[dst, src] in {0, 1}
    dinv = dinv_ref[...]          # (N, 1) f32, D^-1/2 of A + I (precomputed)

    # -------- GCNConv 1: h = D^-1/2 (A+I) D^-1/2 (X W1) + b1 --------
    # Fold the source-side D^-1/2 into the narrow (N, F) input before the
    # matmul, so no scaling pass touches the wide (N, Hpad) tensor.
    xs = (x_ref[...] * dinv).astype(jnp.bfloat16)                         # (N, F)
    s1 = jnp.dot(xs, w1_ref[...],
                 preferred_element_type=jnp.float32)                      # (N, Hpad) = dinv*(X W1)
    agg1 = (jnp.dot(adj, s1.astype(jnp.bfloat16),
                    preferred_element_type=jnp.float32) + s1)             # A@s1 + I@s1
    # dst-side D^-1/2 + bias + ReLU, with layer 2's source-side D^-1/2 and the
    # bf16 cast fused into the same pass (dropout(p=0) is the identity).
    h_s = (jnp.maximum(agg1 * dinv + b1_ref[...], 0.0) * dinv).astype(jnp.bfloat16)

    # -------- GCNConv 2: out = D^-1/2 (A+I) D^-1/2 (h W2) + b2 --------
    s2 = jnp.dot(h_s, w2_ref[...],
                 preferred_element_type=jnp.float32)                      # (N, Cpad)
    agg2 = (jnp.dot(adj, s2.astype(jnp.bfloat16),
                    preferred_element_type=jnp.float32) + s2)
    out = agg2 * dinv + b2_ref[...]            # pad lanes: 0 * dinv + (-1e30)

    # -------- log_softmax over classes (dim=1) --------
    m = jnp.max(out, axis=-1, keepdims=True)
    z = out - m
    lse = jnp.log(jnp.sum(jnp.exp(z), axis=-1, keepdims=True))
    out_ref[...] = z - lse                     # pad lanes ~ -1e30 (sliced off)


def _pad_lanes(n):
    return max(LANE, ((n + LANE - 1) // LANE) * LANE)


def prepare_params(params):
    """One-time parameter prep (padding + dtype casts), hoisted off the call path."""
    F, H = params["w1"].shape
    _, C = params["w2"].shape
    h_pad, c_pad = _pad_lanes(H), _pad_lanes(C)

    # Zero-padded weight columns/rows keep padded lanes at exactly 0 pre-bias;
    # a -1e30 bias on the padded class lanes makes them vanish under softmax.
    w1p = jnp.zeros((F, h_pad), jnp.float32).at[:, :H].set(params["w1"])
    b1p = jnp.zeros((1, h_pad), jnp.float32).at[:, :H].set(params["b1"])
    w2p = jnp.zeros((h_pad, c_pad), jnp.float32).at[:H, :C].set(params["w2"])
    b2p = jnp.full((1, c_pad), -1e30, jnp.float32).at[:, :C].set(params["b2"])

    return {
        "w1": w1p.astype(jnp.bfloat16),
        "b1": b1p,                      # bias stays f32
        "w2": w2p.astype(jnp.bfloat16),
        "b2": b2p,                      # bias stays f32
        "num_classes": C,
    }


def prepare_graph(adj):
    """One-time graph prep: bf16 adjacency + precomputed D^-1/2 of (A + I)."""
    # NOTE: degree is computed from the f32 adjacency (exact); the bf16 copy is
    # only used for the 0/1 aggregation matmuls.
    deg = jnp.sum(adj.astype(jnp.float32), axis=-1, keepdims=True) + 1.0   # (N, 1)
    dinv = jax.lax.rsqrt(deg)
    return adj.astype(jnp.bfloat16), dinv


def gcn_forward(x, adj_bf16, dinv, prepped):
    N = x.shape[0]
    C = prepped["num_classes"]
    c_pad = prepped["w2"].shape[1]

    inputs = (
        adj_bf16,
        dinv,
        x.astype(jnp.float32),
        prepped["w1"],
        prepped["b1"],
        prepped["w2"],
        prepped["b2"],
    )

    vmem = pl.BlockSpec(memory_space=pltpu.MemorySpace.VMEM)
    out_pad = pl.pallas_call(
        gcn_kernel,
        out_shape=jax.ShapeDtypeStruct((N, c_pad), jnp.float32),
        in_specs=[vmem] * len(inputs),
        out_specs=vmem,
        # Toy size: everything fits a few vregs; limit is generous.  For the
        # tiled large-N variant, size this per generation (see header comment).
        compiler_params=pltpu.CompilerParams(vmem_limit_bytes=32 * 1024 * 1024),
    )(*inputs)
    return out_pad[:, :C]


def init_params(key, num_features, num_classes, hidden_dim):
    k1, k2 = jax.random.split(key)
    s1 = 1.0 / jnp.sqrt(num_features)
    s2 = 1.0 / jnp.sqrt(hidden_dim)
    return {
        # GCNConv: linear (no internal bias) + separate additive bias
        "w1": jax.random.uniform(k1, (num_features, hidden_dim), jnp.float32, -s1, s1),
        "b1": jnp.zeros((1, hidden_dim), jnp.float32),
        "w2": jax.random.uniform(k2, (hidden_dim, num_classes), jnp.float32, -s2, s2),
        "b2": jnp.zeros((1, num_classes), jnp.float32),
    }


if __name__ == "__main__":
    N, F, H, C = 16, 8, 32, 8  # nodes, num_features, hidden_dim, num_classes

    key = jax.random.PRNGKey(0)
    kx, kp = jax.random.split(key)
    x = jax.random.normal(kx, (N, F), dtype=jnp.float32)

    # Deterministic graph: bidirectional ring (edge_index -> dense adjacency).
    src = jnp.concatenate([jnp.arange(N), (jnp.arange(N) + 1) % N])
    dst = jnp.concatenate([(jnp.arange(N) + 1) % N, jnp.arange(N)])
    adj = jnp.zeros((N, N), jnp.float32).at[dst, src].set(1.0)  # adj[dst, src]

    # One-time prep (padding / casts / degree normalization) -- off the call path.
    params = init_params(kp, F, C, H)
    prepped = prepare_params(params)
    adj_bf16, dinv = prepare_graph(adj)

    out = gcn_forward(x, adj_bf16, dinv, prepped)
    out = jax.block_until_ready(out)

    assert out.shape == (N, C)
    assert bool(jnp.all(jnp.isfinite(out)))
    # rows of log_softmax must exponentiate-sum to 1
    assert bool(jnp.allclose(jnp.sum(jnp.exp(out), axis=1), 1.0, atol=1e-4))
    print("KERNEL_OK")
</pallas_src>

<mosaic_0001>
module attributes {stable_mosaic.version = 11 : i64} {
  func.func @gcn_kernel(%arg0: memref<16x16xbf16, #tpu.memory_space<vmem>>, %arg1: memref<16x1xf32, #tpu.memory_space<vmem>>, %arg2: memref<16x8xf32, #tpu.memory_space<vmem>>, %arg3: memref<8x128xbf16, #tpu.memory_space<vmem>>, %arg4: memref<1x128xf32, #tpu.memory_space<vmem>>, %arg5: memref<128x128xbf16, #tpu.memory_space<vmem>>, %arg6: memref<1x128xf32, #tpu.memory_space<vmem>>, %arg7: memref<16x128xf32, #tpu.memory_space<vmem>>) attributes {dimension_semantics = [], scalar_prefetch = 0 : i64, scratch_operands = 0 : i64, tpu.core_type = #tpu.core_type<tc>} {
    %c0 = arith.constant 0 : index
    %c0_0 = arith.constant 0 : index
    %0 = vector.load %arg0[%c0, %c0_0] : memref<16x16xbf16, #tpu.memory_space<vmem>>, vector<16x16xbf16>
    %c0_1 = arith.constant 0 : index
    %c0_2 = arith.constant 0 : index
    %1 = vector.load %arg1[%c0_1, %c0_2] : memref<16x1xf32, #tpu.memory_space<vmem>>, vector<16x1xf32>
    %c0_3 = arith.constant 0 : index
    %c0_4 = arith.constant 0 : index
    %2 = vector.load %arg2[%c0_3, %c0_4] : memref<16x8xf32, #tpu.memory_space<vmem>>, vector<16x8xf32>
    %3 = vector.broadcast %1 : vector<16x1xf32> to vector<16x8xf32>
    %4 = arith.mulf %2, %3 : vector<16x8xf32>
    %5 = arith.truncf %4 : vector<16x8xf32> to vector<16x8xbf16>
    %c0_5 = arith.constant 0 : index
    %c0_6 = arith.constant 0 : index
    %6 = vector.load %arg3[%c0_5, %c0_6] : memref<8x128xbf16, #tpu.memory_space<vmem>>, vector<8x128xbf16>
    %cst = arith.constant dense<0.000000e+00> : vector<16x128xf32>
    %7 = tpu.matmul %5, %6, %cst {dimension_numbers = #tpu.dot_dimension_numbers<[1], [0], [0], [1], [0, 0, 1, 1], [], []>} : vector<16x8xbf16>, vector<8x128xbf16>, vector<16x128xf32> -> vector<16x128xf32>
    %8 = arith.truncf %7 : vector<16x128xf32> to vector<16x128xbf16>
    %cst_7 = arith.constant dense<0.000000e+00> : vector<16x128xf32>
    %9 = tpu.matmul %0, %8, %cst_7 {dimension_numbers = #tpu.dot_dimension_numbers<[1], [0], [0], [1], [0, 0, 1, 1], [], []>} : vector<16x16xbf16>, vector<16x128xbf16>, vector<16x128xf32> -> vector<16x128xf32>
    %10 = arith.addf %9, %7 : vector<16x128xf32>
    %11 = vector.broadcast %1 : vector<16x1xf32> to vector<16x128xf32>
    %12 = arith.mulf %10, %11 : vector<16x128xf32>
    %c0_8 = arith.constant 0 : index
    %c0_9 = arith.constant 0 : index
    %13 = vector.load %arg4[%c0_8, %c0_9] : memref<1x128xf32, #tpu.memory_space<vmem>>, vector<1x128xf32>
    %14 = vector.broadcast %13 : vector<1x128xf32> to vector<16x128xf32>
    %15 = arith.addf %12, %14 : vector<16x128xf32>
    %cst_10 = arith.constant 0.000000e+00 : f32
    %16 = vector.broadcast %cst_10 : f32 to vector<16x128xf32>
    %17 = arith.maximumf %15, %16 : vector<16x128xf32>
    %18 = vector.broadcast %1 : vector<16x1xf32> to vector<16x128xf32>
    %19 = arith.mulf %17, %18 : vector<16x128xf32>
    %20 = arith.truncf %19 : vector<16x128xf32> to vector<16x128xbf16>
    %c0_11 = arith.constant 0 : index
    %c0_12 = arith.constant 0 : index
    %21 = vector.load %arg5[%c0_11, %c0_12] : memref<128x128xbf16, #tpu.memory_space<vmem>>, vector<128x128xbf16>
    %cst_13 = arith.constant dense<0.000000e+00> : vector<16x128xf32>
    %22 = tpu.matmul %20, %21, %cst_13 {dimension_numbers = #tpu.dot_dimension_numbers<[1], [0], [0], [1], [0, 0, 1, 1], [], []>} : vector<16x128xbf16>, vector<128x128xbf16>, vector<16x128xf32> -> vector<16x128xf32>
    %23 = arith.truncf %22 : vector<16x128xf32> to vector<16x128xbf16>
    %cst_14 = arith.constant dense<0.000000e+00> : vector<16x128xf32>
    %24 = tpu.matmul %0, %23, %cst_14 {dimension_numbers = #tpu.dot_dimension_numbers<[1], [0], [0], [1], [0, 0, 1, 1], [], []>} : vector<16x16xbf16>, vector<16x128xbf16>, vector<16x128xf32> -> vector<16x128xf32>
    %25 = arith.addf %24, %22 : vector<16x128xf32>
    %26 = vector.broadcast %1 : vector<16x1xf32> to vector<16x128xf32>
    %27 = arith.mulf %25, %26 : vector<16x128xf32>
    %c0_15 = arith.constant 0 : index
    %c0_16 = arith.constant 0 : index
    %28 = vector.load %arg6[%c0_15, %c0_16] : memref<1x128xf32, #tpu.memory_space<vmem>>, vector<1x128xf32>
    %29 = vector.broadcast %28 : vector<1x128xf32> to vector<16x128xf32>
    %30 = arith.addf %27, %29 : vector<16x128xf32>
    %cst_17 = arith.constant dense<0xFF800000> : vector<16xf32>
    %31 = vector.multi_reduction <maximumf>, %30, %cst_17 [1] : vector<16x128xf32> to vector<16xf32>
    %32 = vector.shape_cast %31 : vector<16xf32> to vector<16x1xf32>
    %33 = vector.broadcast %32 : vector<16x1xf32> to vector<16x128xf32>
    %34 = arith.subf %30, %33 : vector<16x128xf32>
    %35 = math.exp %34 : vector<16x128xf32>
    %cst_18 = arith.constant dense<0.000000e+00> : vector<16xf32>
    %36 = vector.multi_reduction <add>, %35, %cst_18 [1] : vector<16x128xf32> to vector<16xf32>
    %37 = vector.shape_cast %36 : vector<16xf32> to vector<16x1xf32>
    %38 = math.log %37 : vector<16x1xf32>
    %39 = vector.broadcast %38 : vector<16x1xf32> to vector<16x128xf32>
    %40 = arith.subf %34, %39 : vector<16x128xf32>
    %c0_19 = arith.constant 0 : index
    %c0_20 = arith.constant 0 : index
    %41 = vector.load %arg7[%c0_19, %c0_20] : memref<16x128xf32, #tpu.memory_space<vmem>>, vector<16x128xf32>
    tpu.vector_store %arg7[%c0_19, %c0_20], %40 {strides = array<i32>} : memref<16x128xf32, #tpu.memory_space<vmem>>, vector<16x128xf32>,
    return
  }
}

</mosaic_0001>

<llo_original>
// kernel: tpu_custom_call.1
$region0: #{tpu_custom_call.1}
  #allocation0 [shape = 'u32[]', space=smem, size = 0x4, offset = 0x4, fixed_abs, tag = 'smem constant byte address 0x4 - core index']
  #allocation1 [shape = 'u32[144,128]{1,0:T(1,128)}', space=vmem, size = 0x12000, scoped, tag = 'internal scratch']
  %s0 = inlined_call_operand.vmem [shape: bf16[16,16], index: 0, kind: input, shape index: {}]
  %s1 = inlined_call_operand.vmem [shape: f32[16,1], index: 1, kind: input, shape index: {}]
  %s2 = inlined_call_operand.vmem [shape: f32[16,8], index: 2, kind: input, shape index: {}]
  %s3 = inlined_call_operand.vmem [shape: bf16[8,128], index: 3, kind: input, shape index: {}]
  %s4 = inlined_call_operand.vmem [shape: f32[1,128], index: 4, kind: input, shape index: {}]
  %s5 = inlined_call_operand.hbm [shape: bf16[128,128], index: 5, kind: input, shape index: {}]
  %s6 = inlined_call_operand.vmem [shape: f32[1,128], index: 6, kind: input, shape index: {}]
  %s7 = inlined_call_operand.hbm [shape: f32[16,128], index: 7, kind: output, shape index: {}]
  %s8 = sld [smem:[#allocation0]]
  $region42: #{tpu_custom_call.1} parent=0
    _
  %s10 = ssub.s32 1, %s8
  %s11 = scalar_select 0, %s10, %s8
  $region1: #{tpu_custom_call.1} parent=0
    #allocation2 [shape = 'u8[32768]{0}', space=vmem, size = 0x8000, scoped, tag = 'input window, operand 5, single buffered']
    #allocation3 [shape = 's32[1]{0}', space=sflag, size = 0x4, scoped, tag = 'scoped memory for tpu_custom_call.1']
    #allocation4 [shape = 's32[1]{0}', space=sflag, size = 0x4, scoped, tag = 'scoped memory for tpu_custom_call.1']
    #allocation5 [shape = 'u8[8192]{0}', space=vmem, size = 0x2000, scoped, tag = 'output window, operand 0, single buffered']
    %12 = vsyncpa [#allocation3], 0
    %13 = vsyncpa [#allocation4], 0
    // Predicated region
    $region2: #{tpu_custom_call.1} parent=1 // pred_check
      _
    $region3: #{tpu_custom_call.1} parent=1 // pred_check_branch
      %15 = sbr.rel (0) target = $region5
    $region4: #{tpu_custom_call.1} parent=1 // pred_region
      _
    $region5: #{tpu_custom_call.1} parent=1 // pred_fallthru
      _
    // Predicated region
    $region6: #{tpu_custom_call.1} parent=1 // pred_check
      _
    $region7: #{tpu_custom_call.1} parent=1 // pred_check_branch
      %17 = sbr.rel (0) target = $region9
    $region8: #{tpu_custom_call.1} parent=1 // pred_region
      _
    $region9: #{tpu_custom_call.1} parent=1 // pred_fallthru
      _
    // Predicated region
    $region10: #{tpu_custom_call.1} parent=1 // pred_check
      _
    $region11: #{tpu_custom_call.1} parent=1 // pred_check_branch
      %19 = sbr.rel (0) target = $region13
    $region12: #{tpu_custom_call.1} parent=1 // pred_region
      _
    $region13: #{tpu_custom_call.1} parent=1 // pred_fallthru
      _
    // Predicated region
    $region14: #{tpu_custom_call.1} parent=1 // pred_check
      _
    $region15: #{tpu_custom_call.1} parent=1 // pred_check_branch
      %21 = sbr.rel (0) target = $region17
    $region16: #{tpu_custom_call.1} parent=1 // pred_region
      _
    $region17: #{tpu_custom_call.1} parent=1 // pred_fallthru
      _
    // Predicated region
    $region18: #{tpu_custom_call.1} parent=1 // pred_check
      _
    $region19: #{tpu_custom_call.1} parent=1 // pred_check_branch
      %23 = sbr.rel (0) target = $region21
    $region20: #{tpu_custom_call.1} parent=1 // pred_region
      _
    $region21: #{tpu_custom_call.1} parent=1 // pred_fallthru
      _
    // Predicated region
    $region22: #{tpu_custom_call.1} parent=1 // pred_check
      _
    $region23: #{tpu_custom_call.1} parent=1 // pred_check_branch
      %25 = sbr.rel (0) target = $region25
    $region24: #{tpu_custom_call.1} parent=1 // pred_region
      %s27 = ssub.s32 1024, 1024
      %28 = vsyncadd [#allocation3], %s27
      %s29 = sshll.u32 [#allocation2], 4
      %s30 = int_to_ptr.vmem [resolvable:$true] %s29
      %35 = dma.hbm_to_vmem [thread:$0]  %s5, 1024, %s30, [#allocation3], 64, 64, 4
    $region25: #{tpu_custom_call.1} parent=1 // pred_fallthru
      _
    // Predicated region
    $region26: #{tpu_custom_call.1} parent=1 // pred_check
      _
    $region27: #{tpu_custom_call.1} parent=1 // pred_check_branch
      %37 = sbr.rel (0) target = $region29
    $region28: #{tpu_custom_call.1} parent=1 // pred_region
      _
    $region29: #{tpu_custom_call.1} parent=1 // pred_fallthru
      _
    // Predicated region
    $region30: #{tpu_custom_call.1} parent=1 // pred_check
      _
    $region31: #{tpu_custom_call.1} parent=1 // pred_check_branch
      %39 = sbr.rel (0) target = $region33
    $region32: #{tpu_custom_call.1} parent=1 // pred_region
      %40 = dma.done [#allocation3], 1024
    $region33: #{tpu_custom_call.1} parent=1 // pred_fallthru
      _
    %v42 = vld [vmem:[%s0] sm:$0xf]
    %v43 = vld [vmem:[%s0 + $0x4] sm:$0xf]
    %v44 = vld [vmem:[%s1] sm:$0xff]
    %v45 = vld [vmem:[%s1 + $0x8] sm:$0xff]
    %v46 = vld [vmem:[%s2] sm:$0xff]
    %v47 = vld [vmem:[%s2 + $0x8] sm:$0xff]
    %49 = vset.pattern.permute.xlu0 0
    %50 = vperm.xlu0 %49, %v44
    %v51 = vpop.permute.xlu0 %50
    %54 = vset.pattern.permute.xlu0 0
    %55 = vperm.xlu0 %54, %v45
    %v56 = vpop.permute.xlu0 %55
    %v58 = vmul.f32 %v46, %v51
    %v59 = vmul.f32 %v47, %v56
    %v60 = vpack.c.bf16 %v59, %v58
    %v61 = vld [vmem:[%s3] sm:$0xf]
    %vm62 = vcmask 64512
    %v64 = vsel %vm62, %v60, 0
    %vm66 = vcmask 1043456
    %v68 = vsel %vm66, %v61, 0
    %70 = vmatprep.subr.bf16.mxu0 0
    %71 = vmatpush1.bf16.msra.mxu0 %v68
    %72 = vmatprep.subr.bf16.mxu0 0
    %73 = vmatpush1.bf16.msra.mxu0 0
    %74 = vmatprep.subr.bf16.mxu0 0
    %75 = vmatpush1.bf16.msra.mxu0 0
    %76 = vmatprep.subr.bf16.mxu0 0
    %77 = vmatpush1.bf16.msra.mxu0 0
    %78 = vmatprep.subr.bf16.mxu0 0
    %79 = vmatpush1.bf16.msra.mxu0 0
    %80 = vmatprep.subr.bf16.mxu0 0
    %81 = vmatpush1.bf16.msra.mxu0 0
    %82 = vmatprep.subr.bf16.mxu0 0
    %83 = vmatpush1.bf16.msra.mxu0 0
    %84 = vmatprep.subr.bf16.mxu0 0
    %85 = vmatpush1.bf16.msra.mxu0 0
    %86 = vmatprep.subr.bf16.mxu0 0
    %87 = vmatpush1.bf16.msra.mxu0 0
    %88 = vmatprep.subr.bf16.mxu0 0
    %89 = vmatpush1.bf16.msra.mxu0 0
    %90 = vmatprep.subr.bf16.mxu0 0
    %91 = vmatpush1.bf16.msra.mxu0 0
    %92 = vmatprep.subr.bf16.mxu0 0
    %93 = vmatpush1.bf16.msra.mxu0 0
    %94 = vmatprep.subr.bf16.mxu0 0
    %95 = vmatpush1.bf16.msra.mxu0 0
    %96 = vmatprep.subr.bf16.mxu0 0
    %97 = vmatpush1.bf16.msra.mxu0 0
    %98 = vmatprep.subr.bf16.mxu0 0
    %99 = vmatpush1.bf16.msra.mxu0 0
    %100 = vmatprep.subr.bf16.mxu0 0
    %101 = vmatpush1.bf16.msra.mxu0 0
    %102 = vmatprep.mubr.bf16.mxu0 0
    %103 = vmatmul.mubr.bf16.gmra.mrb[0].mxu0 %v64
    %v104 = vpop.f32.mrb[0].mxu0
    %v105 = vadd.f32 0.0, %v104
    %v106 = vpop.f32.mrb[0].mxu0
    %v107 = vpop.f32.mrb[0].mxu0
    %v108 = vadd.f32 0.0, %v107
    %v109 = vpop.f32.mrb[0].mxu0
    %110 = vdwg.mxu0
    %v111 = vpack.c.bf16 %v108, %v105
    %v114 = vunpack.c.l.b16 %v42
    %v115 = vunpack.c.l.b16 %v43
    %v116 = vpack.c.b16 %v115, %v114
    %vm117 = vcmask 130048
    %v119 = vsel %vm117, %v116, 0
    %121 = vmatprep.subr.bf16.mxu0 0
    %122 = vmatpush1.bf16.msra.mxu0 %v111
    %123 = vmatprep.subr.bf16.mxu0 0
    %124 = vmatpush1.bf16.msra.mxu0 0
    %125 = vmatprep.subr.bf16.mxu0 0
    %126 = vmatpush1.bf16.msra.mxu0 0
    %127 = vmatprep.subr.bf16.mxu0 0
    %128 = vmatpush1.bf16.msra.mxu0 0
    %129 = vmatprep.subr.bf16.mxu0 0
    %130 = vmatpush1.bf16.msra.mxu0 0
    %131 = vmatprep.subr.bf16.mxu0 0
    %132 = vmatpush1.bf16.msra.mxu0 0
    %133 = vmatprep.subr.bf16.mxu0 0
    %134 = vmatpush1.bf16.msra.mxu0 0
    %135 = vmatprep.subr.bf16.mxu0 0
    %136 = vmatpush1.bf16.msra.mxu0 0
    %137 = vmatprep.subr.bf16.mxu0 0
    %138 = vmatpush1.bf16.msra.mxu0 0
    %139 = vmatprep.subr.bf16.mxu0 0
    %140 = vmatpush1.bf16.msra.mxu0 0
    %141 = vmatprep.subr.bf16.mxu0 0
    %142 = vmatpush1.bf16.msra.mxu0 0
    %143 = vmatprep.subr.bf16.mxu0 0
    %144 = vmatpush1.bf16.msra.mxu0 0
    %145 = vmatprep.subr.bf16.mxu0 0
    %146 = vmatpush1.bf16.msra.mxu0 0
    %147 = vmatprep.subr.bf16.mxu0 0
    %148 = vmatpush1.bf16.msra.mxu0 0
    %149 = vmatprep.subr.bf16.mxu0 0
    %150 = vmatpush1.bf16.msra.mxu0 0
    %151 = vmatprep.subr.bf16.mxu0 0
    %152 = vmatpush1.bf16.msra.mxu0 0
    %153 = vmatprep.mubr.bf16.mxu0 0
    %154 = vmatmul.mubr.bf16.gmra.mrb[0].mxu0 %v119
    %v155 = vpop.f32.mrb[0].mxu0
    %v156 = vadd.f32 %v105, %v155
    %v157 = vpop.f32.mrb[0].mxu0
    %v158 = vpop.f32.mrb[0].mxu0
    %v159 = vadd.f32 %v108, %v158
    %v160 = vpop.f32.mrb[0].mxu0
    %161 = vdwg.mxu0
    %v162 = vmul.f32 %v156, %v51
    %v163 = vmul.f32 %v159, %v56
    %v164 = vld [vmem:[%s4] sm:$0x1]
    %v166 = vlaneseq
    %v167 = vshrl.u32 %v166, 7
    %v168 = vsub.s32 0, %v167
    %v169 = vrot.slane %v164, %v168
    %v171 = vadd.f32 %v162, %v169
    %v172 = vadd.f32 %v163, %v169
    %v173 = vmax.f32 %v171, 0.0
    %v174 = vmax.f32 %v172, 0.0
    %v175 = vmul.f32 %v173, %v51
    %v176 = vmul.f32 %v174, %v56
    %v177 = vpack.c.bf16 %v176, %v175
    %v178 = vld [vmem:[#allocation2] sm:$0xf]
    %v179 = vld [vmem:[#allocation2 + $0x4] sm:$0xf]
    %v180 = vld [vmem:[#allocation2 + $0x8] sm:$0xf]
    %v181 = vld [vmem:[#allocation2 + $0xc] sm:$0xf]
    %v182 = vld [vmem:[#allocation2 + $0x10] sm:$0xf]
    %v183 = vld [vmem:[#allocation2 + $0x14] sm:$0xf]
    %v184 = vld [vmem:[#allocation2 + $0x18] sm:$0xf]
    %v185 = vld [vmem:[#allocation2 + $0x1c] sm:$0xf]
    %v186 = vld [vmem:[#allocation2 + $0x20] sm:$0xf]
    %v187 = vld [vmem:[#allocation2 + $0x24] sm:$0xf]
    %v188 = vld [vmem:[#allocation2 + $0x28] sm:$0xf]
    %v189 = vld [vmem:[#allocation2 + $0x2c] sm:$0xf]
    %v190 = vld [vmem:[#allocation2 + $0x30] sm:$0xf]
    %v191 = vld [vmem:[#allocation2 + $0x34] sm:$0xf]
    %v192 = vld [vmem:[#allocation2 + $0x38] sm:$0xf]
    %v193 = vld [vmem:[#allocation2 + $0x3c] sm:$0xf]
    %v210 = vunpack.c.l.b16 %v178
    %v211 = vunpack.c.l.b16 %v179
    %v212 = vunpack.c.l.b16 %v180
    %v213 = vunpack.c.l.b16 %v181
    %v214 = vunpack.c.l.b16 %v182
    %v215 = vunpack.c.l.b16 %v183
    %v216 = vunpack.c.l.b16 %v184
    %v217 = vunpack.c.l.b16 %v185
    %v218 = vunpack.c.l.b16 %v186
    %v219 = vunpack.c.l.b16 %v187
    %v220 = vunpack.c.l.b16 %v188
    %v221 = vunpack.c.l.b16 %v189
    %v222 = vunpack.c.l.b16 %v190
    %v223 = vunpack.c.l.b16 %v191
    %v224 = vunpack.c.l.b16 %v192
    %v225 = vunpack.c.l.b16 %v193
    %v226 = vpack.c.b16 %v211, %v210
    %v227 = vpack.c.b16 %v213, %v212
    %v228 = vpack.c.b16 %v215, %v214
    %v229 = vpack.c.b16 %v217, %v216
    %v230 = vpack.c.b16 %v219, %v218
    %v231 = vpack.c.b16 %v221, %v220
    %v232 = vpack.c.b16 %v223, %v222
    %v233 = vpack.c.b16 %v225, %v224
    %242 = vmatprep.subr.bf16.mxu0 0
    %243 = vmatpush1.bf16.msra.mxu0 %v226
    %244 = vmatprep.subr.bf16.mxu0 0
    %245 = vmatpush1.bf16.msra.mxu0 %v227
    %246 = vmatprep.subr.bf16.mxu0 0
    %247 = vmatpush1.bf16.msra.mxu0 %v228
    %248 = vmatprep.subr.bf16.mxu0 0
    %249 = vmatpush1.bf16.msra.mxu0 %v229
    %250 = vmatprep.subr.bf16.mxu0 0
    %251 = vmatpush1.bf16.msra.mxu0 %v230
    %252 = vmatprep.subr.bf16.mxu0 0
    %253 = vmatpush1.bf16.msra.mxu0 %v231
    %254 = vmatprep.subr.bf16.mxu0 0
    %255 = vmatpush1.bf16.msra.mxu0 %v232
    %256 = vmatprep.subr.bf16.mxu0 0
    %257 = vmatpush1.bf16.msra.mxu0 %v233
    %258 = vmatprep.subr.bf16.mxu0 0
    %259 = vmatpush1.bf16.msra.mxu0 0
    %260 = vmatprep.subr.bf16.mxu0 0
    %261 = vmatpush1.bf16.msra.mxu0 0
    %262 = vmatprep.subr.bf16.mxu0 0
    %263 = vmatpush1.bf16.msra.mxu0 0
    %264 = vmatprep.subr.bf16.mxu0 0
    %265 = vmatpush1.bf16.msra.mxu0 0
    %266 = vmatprep.subr.bf16.mxu0 0
    %267 = vmatpush1.bf16.msra.mxu0 0
    %268 = vmatprep.subr.bf16.mxu0 0
    %269 = vmatpush1.bf16.msra.mxu0 0
    %270 = vmatprep.subr.bf16.mxu0 0
    %271 = vmatpush1.bf16.msra.mxu0 0
    %272 = vmatprep.subr.bf16.mxu0 0
    %273 = vmatpush1.bf16.msra.mxu0 0
    %274 = vmatprep.mubr.bf16.mxu0 0
    %275 = vmatmul.mubr.bf16.gmra.mrb[0].mxu0 %v177
    %v276 = vpop.f32.mrb[0].mxu0
    %v277 = vadd.f32 0.0, %v276
    %v278 = vpop.f32.mrb[0].mxu0
    %v279 = vpop.f32.mrb[0].mxu0
    %v280 = vadd.f32 0.0, %v279
    %v281 = vpop.f32.mrb[0].mxu0
    %282 = vdwg.mxu0
    %v283 = vpack.c.bf16 %v280, %v277
    %284 = vmatprep.subr.bf16.mxu0 0
    %285 = vmatpush1.bf16.msra.mxu0 %v283
    %286 = vmatprep.subr.bf16.mxu0 0
    %287 = vmatpush1.bf16.msra.mxu0 0
    %288 = vmatprep.subr.bf16.mxu0 0
    %289 = vmatpush1.bf16.msra.mxu0 0
    %290 = vmatprep.subr.bf16.mxu0 0
    %291 = vmatpush1.bf16.msra.mxu0 0
    %292 = vmatprep.subr.bf16.mxu0 0
    %293 = vmatpush1.bf16.msra.mxu0 0
    %294 = vmatprep.subr.bf16.mxu0 0
    %295 = vmatpush1.bf16.msra.mxu0 0
    %296 = vmatprep.subr.bf16.mxu0 0
    %297 = vmatpush1.bf16.msra.mxu0 0
    %298 = vmatprep.subr.bf16.mxu0 0
    %299 = vmatpush1.bf16.msra.mxu0 0
    %300 = vmatprep.subr.bf16.mxu0 0
    %301 = vmatpush1.bf16.msra.mxu0 0
    %302 = vmatprep.subr.bf16.mxu0 0
    %303 = vmatpush1.bf16.msra.mxu0 0
    %304 = vmatprep.subr.bf16.mxu0 0
    %305 = vmatpush1.bf16.msra.mxu0 0
    %306 = vmatprep.subr.bf16.mxu0 0
    %307 = vmatpush1.bf16.msra.mxu0 0
    %308 = vmatprep.subr.bf16.mxu0 0
    %309 = vmatpush1.bf16.msra.mxu0 0
    %310 = vmatprep.subr.bf16.mxu0 0
    %311 = vmatpush1.bf16.msra.mxu0 0
    %312 = vmatprep.subr.bf16.mxu0 0
    %313 = vmatpush1.bf16.msra.mxu0 0
    %314 = vmatprep.subr.bf16.mxu0 0
    %315 = vmatpush1.bf16.msra.mxu0 0
    %316 = vmatprep.mubr.bf16.mxu0 0
    %317 = vmatmul.mubr.bf16.gmra.mrb[0].mxu0 %v119
    %v318 = vpop.f32.mrb[0].mxu0
    %v319 = vadd.f32 %v277, %v318
    %v320 = vpop.f32.mrb[0].mxu0
    %v321 = vpop.f32.mrb[0].mxu0
    %v322 = vadd.f32 %v280, %v321
    %v323 = vpop.f32.mrb[0].mxu0
    %324 = vdwg.mxu0
    %v325 = vmul.f32 %v319, %v51
    %v326 = vmul.f32 %v322, %v56
    %v327 = vld [vmem:[%s6] sm:$0x1]
    %v329 = vlaneseq
    %v330 = vshrl.u32 %v329, 7
    %v331 = vsub.s32 0, %v330
    %v332 = vrot.slane %v327, %v331
    %v334 = vadd.f32 %v325, %v332
    %v335 = vadd.f32 %v326, %v332
    %336 = vmax.xlane.f32.xlu0 %v334
    %v337 = vpop.xlane.xlu0 %336
    %338 = vmax.xlane.f32.xlu0 %v335
    %v339 = vpop.xlane.xlu0 %338
    %v340 = vsub.f32 %v334, %v337
    %v341 = vsub.f32 %v335, %v339
    %v342 = vmul.f32 %v340, 1.442695
    %v343 = vpow.pop %v342
    %v344 = vmul.f32 %v341, 1.442695
    %v345 = vpow.pop %v344
    %346 = vadd.xlane.f32.xlu0 %v343
    %v347 = vpop.xlane.xlu0 %346
    %348 = vadd.xlane.f32.xlu0 %v345
    %v349 = vpop.xlane.xlu0 %348
    %v350 = vlog2.pop %v347
    %v351 = vmul.f32 %v350, 0.6931472
    %v352 = vlog2.pop %v349
    %v353 = vmul.f32 %v352, 0.6931472
    %v354 = vsub.f32 %v340, %v351
    %v355 = vsub.f32 %v341, %v353
    %356 = vst [vmem:[#allocation5] sm:$0xff] %v354
    %357 = vst [vmem:[#allocation5 + $0x8] sm:$0xff] %v355
    // Predicated region
    $region34: #{tpu_custom_call.1} parent=1 // pred_check
      _
    $region35: #{tpu_custom_call.1} parent=1 // pred_check_branch
      %359 = sbr.rel (0) target = $region37
    $region36: #{tpu_custom_call.1} parent=1 // pred_region
      %s361 = ssub.s32 256, 256
      %362 = vsyncadd [#allocation4], %s361
      %s363 = sshll.u32 [#allocation5], 4
      %s364 = int_to_ptr.vmem [resolvable:$true] %s363
      %369 = dma.vmem_to_hbm [thread:$0]  %s364, 256, %s7, [#allocation4], 128, 128, 8
    $region37: #{tpu_custom_call.1} parent=1 // pred_fallthru
      _
    // Predicated region
    $region38: #{tpu_custom_call.1} parent=1 // pred_check
      _
    $region39: #{tpu_custom_call.1} parent=1 // pred_check_branch
      %371 = sbr.rel (0) target = $region41
    $region40: #{tpu_custom_call.1} parent=1 // pred_region
      %372 = dma.done [#allocation4], 256
    $region41: #{tpu_custom_call.1} parent=1 // pred_fallthru
      _
    %373 = vsyncpa [#allocation3], 1
    %374 = vsyncpa [#allocation4], 1

</llo_original>
